<compile_context>
chip_gen: v7x
topology: tpu7x:2x2x1
jax: 0.10.0
libtpu: 0.0.40
codegen_flags: <defaults>
</compile_context>

<pallas_src>
import jax
import jax.numpy as jnp
from jax.experimental import pallas as pl
from jax.experimental.pallas import tpu as pltpu

LN_EPS = 1e-5


def _patch_embed_kernel(x_ref, cls_ref, pos_ref, g_ref, b_ref, o_ref):
    # x_ref:   (1, TN, D)    patch rows for this (batch, token-tile)
    # cls_ref: (1, 1, D)     cls_token + pos_embedding[:, 0]   (pre-folded, f32)
    # pos_ref: (1, TN, D)    pos_embedding rows for this token tile (patch part)
    # g_ref:   (1, 1, D)     LayerNorm gamma (f32)
    # b_ref:   (1, 1, D)     LayerNorm beta  (f32)
    # o_ref:   (1, N+1, D)   full output tokens for this batch element
    #                        (resident block across the token-tile grid axis)
    t = pl.program_id(1)
    tn = x_ref.shape[1]

    x = x_ref[...].astype(jnp.float32)
    mean = jnp.mean(x, axis=-1, keepdims=True)
    centered = x - mean
    var = jnp.mean(centered * centered, axis=-1, keepdims=True)
    y = centered * jax.lax.rsqrt(var + LN_EPS)
    y = y * g_ref[...] + b_ref[...]
    y = y + pos_ref[...].astype(jnp.float32)

    @pl.when(t == 0)
    def _():
        # cls row (already includes pos[0]); written once per batch element.
        o_ref[:, 0:1, :] = cls_ref[...].astype(o_ref.dtype)

    # Patch rows for this tile land at token rows [1 + t*TN, 1 + (t+1)*TN).
    o_ref[:, pl.ds(1 + t * tn, tn), :] = y.astype(o_ref.dtype)


def _pick_token_tile(n, max_tile):
    """Largest multiple-of-8 divisor of n that is <= max_tile (else n itself)."""
    if n <= max_tile:
        return n
    start = (max_tile // 8) * 8
    for cand in range(start, 7, -8):
        if n % cand == 0:
            return cand
    return n  # fallback: single tile (rare: no multiple-of-8 divisor)


def _vmem_limit_bytes(n_out_rows, tile_rows, d, in_bytes, out_bytes):
    """Estimate required VMEM and cap below physical capacity (v7x = 64 MiB)."""
    need = 2 * tile_rows * d * in_bytes          # patches tile, double-buffered
    need += 2 * tile_rows * d * in_bytes         # pos tile, double-buffered
    need += 2 * n_out_rows * d * out_bytes       # resident output block (2 bufs)
    need += 2 * 3 * d * 4                        # cls / gamma / beta (f32)
    try:
        cap = getattr(pltpu.get_tpu_info(), "vmem_capacity_bytes", None) or (64 << 20)
    except Exception:
        cap = 64 << 20
    hard_cap = (cap * 3) // 4                    # headroom for compiler scratch
    return int(max(16 << 20, min(int(need * 1.5) + (2 << 20), hard_cap)))


def patch_embedding_forward(x, gamma, beta, cls_token, pos_embedding, patch_size,
                            *, out_dtype=None, stream_dtype=None,
                            max_tile_tokens=1024):
    """
    x:             (B, C, H, W)
    gamma, beta:   (D,) LayerNorm affine params, D = C * P * P
    cls_token:     (1, 1, D)
    pos_embedding: (1, N+1, D), N = (H//P) * (W//P)
    returns:       (B, N+1, D)

    stream_dtype / out_dtype: set to jnp.bfloat16 to halve HBM traffic on this
    memory-bound op (LN math stays f32).  Defaults preserve exact f32 semantics.
    """
    B, C, H, W = x.shape
    P = int(patch_size)
    assert H % P == 0 and W % P == 0, "Image dimensions must be divisible by the patch size."
    Hp, Wp = H // P, W // P
    N = Hp * Wp
    D = C * P * P
    out_dtype = out_dtype or x.dtype
    stream_dtype = stream_dtype or x.dtype

    # Patchify: 'b c (h p1) (w p2) -> b (h w) (p1 p2 c)' as one fused XLA
    # reshape/transpose pass (see TODO(synk) at top about fusing this in-kernel).
    patches = x.reshape(B, C, Hp, P, Wp, P)
    patches = jnp.transpose(patches, (0, 2, 4, 3, 5, 1)).reshape(B, N, D)
    patches = patches.astype(stream_dtype)

    pos = pos_embedding[:, : N + 1, :]
    cls_row = (cls_token.reshape(1, 1, D).astype(jnp.float32)
               + pos[:, 0:1, :].astype(jnp.float32))           # (1, 1, D)
    pos_tok = pos[:, 1:, :].astype(stream_dtype)               # (1, N, D)
    gamma3 = gamma.reshape(1, 1, D).astype(jnp.float32)
    beta3 = beta.reshape(1, 1, D).astype(jnp.float32)

    TN = _pick_token_tile(N, max_tile_tokens)
    NT = N // TN

    in_it = jnp.dtype(stream_dtype).itemsize
    out_it = jnp.dtype(out_dtype).itemsize
    vmem_limit = _vmem_limit_bytes(N + 1, TN, D, in_it, out_it)

    cost = pl.CostEstimate(
        flops=int(10 * B * N * D),
        transcendentals=int(B * N),
        bytes_accessed=int(in_it * (B * N * D + B * N * D)      # patches + pos reads
                           + out_it * B * (N + 1) * D           # output write
                           + 4 * 3 * D),                        # tiny params
    )

    return pl.pallas_call(
        _patch_embed_kernel,
        out_shape=jax.ShapeDtypeStruct((B, N + 1, D), out_dtype),
        grid_spec=pltpu.PrefetchScalarGridSpec(
            num_scalar_prefetch=0,
            grid=(B, NT),
            in_specs=[
                pl.BlockSpec((1, TN, D), lambda b, t: (b, t, 0)),   # patch tile
                pl.BlockSpec((1, 1, D), lambda b, t: (0, 0, 0)),    # cls + pos[0]
                pl.BlockSpec((1, TN, D), lambda b, t: (0, t, 0)),   # pos tile
                pl.BlockSpec((1, 1, D), lambda b, t: (0, 0, 0)),    # gamma
                pl.BlockSpec((1, 1, D), lambda b, t: (0, 0, 0)),    # beta
            ],
            # Output block is the full (N+1, D) token slab per batch element,
            # resident across the token-tile axis; written back once per b.
            out_specs=pl.BlockSpec((1, N + 1, D), lambda b, t: (b, 0, 0)),
        ),
        compiler_params=pltpu.CompilerParams(
            dimension_semantics=("parallel", "arbitrary"),
            vmem_limit_bytes=vmem_limit,
        ),
        cost_estimate=cost,
    )(patches, cls_row, pos_tok, gamma3, beta3)


def _reference(x, gamma, beta, cls_token, pos_embedding, P):
    """Pure-JAX reference mirroring the torch module line by line (dropout=identity)."""
    B, C, H, W = x.shape
    Hp, Wp = H // P, W // P
    N, D = Hp * Wp, C * P * P
    patches = x.reshape(B, C, Hp, P, Wp, P)
    patches = jnp.transpose(patches, (0, 2, 4, 3, 5, 1)).reshape(B, N, D)
    mean = jnp.mean(patches, axis=-1, keepdims=True)
    var = jnp.mean((patches - mean) ** 2, axis=-1, keepdims=True)
    xn = (patches - mean) / jnp.sqrt(var + LN_EPS) * gamma + beta
    cls = jnp.broadcast_to(cls_token.reshape(1, 1, D), (B, 1, D))
    tok = jnp.concatenate([cls, xn], axis=1)                 # (B, N+1, D)
    tok = tok + pos_embedding[:, : N + 1, :]
    return tok


if __name__ == "__main__":
    B, C, H, W = 2, 4, 16, 16
    P = 4
    D = C * P * P                 # 64
    N = (H // P) * (W // P)       # 16

    key = jax.random.PRNGKey(0)
    kx, kc, kp, kg, kb = jax.random.split(key, 5)

    x = jax.random.normal(kx, (B, C, H, W), dtype=jnp.float32)
    cls_token = jax.random.normal(kc, (1, 1, D), dtype=jnp.float32)
    pos_embedding = jax.random.normal(kp, (1, N + 1, D), dtype=jnp.float32)
    gamma = 1.0 + 0.01 * jax.random.normal(kg, (D,), jnp.float32)
    beta = 0.01 * jax.random.normal(kb, (D,), jnp.float32)

    # max_tile_tokens=8 -> TN=8, 2 token tiles per batch element: exercises the
    # multi-tile path (resident output + pl.when cls write) at the small test size.
    out = patch_embedding_forward(x, gamma, beta, cls_token, pos_embedding,
                                  patch_size=P, max_tile_tokens=8)
    out = jax.block_until_ready(out)

    ref = _reference(x, gamma, beta, cls_token, pos_embedding, P)
    assert out.shape == (B, N + 1, D), out.shape
    assert jnp.allclose(out, ref, atol=1e-5, rtol=1e-5), float(jnp.max(jnp.abs(out - ref)))
    print("KERNEL_OK")
</pallas_src>

<mosaic_0001>
module attributes {stable_mosaic.version = 11 : i64} {
  func.func @_patch_embed_kernel(%arg0: i32, %arg1: i32, %arg2: memref<1x8x64xf32, #tpu.memory_space<vmem>>, %arg3: memref<1x1x64xf32, #tpu.memory_space<vmem>>, %arg4: memref<1x8x64xf32, #tpu.memory_space<vmem>>, %arg5: memref<1x1x64xf32, #tpu.memory_space<vmem>>, %arg6: memref<1x1x64xf32, #tpu.memory_space<vmem>>, %arg7: memref<1x17x64xf32, #tpu.memory_space<vmem>>) attributes {dimension_semantics = [#tpu.dimension_semantics<parallel>, #tpu.dimension_semantics<arbitrary>], iteration_bounds = array<i64: 2, 2>, scalar_prefetch = 0 : i64, scratch_operands = 0 : i64, tpu.core_type = #tpu.core_type<tc>, window_params = [{transform_indices = @transform_0, window_bounds = array<i64: 1, 8, 64>}, {pipeline_mode = #tpu.pipeline_mode<synchronous>, transform_indices = @transform_1, window_bounds = array<i64: 1, 1, 64>}, {transform_indices = @transform_2, window_bounds = array<i64: 1, 8, 64>}, {pipeline_mode = #tpu.pipeline_mode<synchronous>, transform_indices = @transform_3, window_bounds = array<i64: 1, 1, 64>}, {pipeline_mode = #tpu.pipeline_mode<synchronous>, transform_indices = @transform_4, window_bounds = array<i64: 1, 1, 64>}, {transform_indices = @transform_5, window_bounds = array<i64: 1, 17, 64>}]} {
    %c0 = arith.constant 0 : index
    %c0_0 = arith.constant 0 : index
    %c0_1 = arith.constant 0 : index
    %0 = vector.load %arg2[%c0, %c0_0, %c0_1] : memref<1x8x64xf32, #tpu.memory_space<vmem>>, vector<1x8x64xf32>
    %cst = arith.constant dense<0.000000e+00> : vector<1x8xf32>
    %1 = vector.multi_reduction <add>, %0, %cst [2] : vector<1x8x64xf32> to vector<1x8xf32>
    %2 = vector.shape_cast %1 : vector<1x8xf32> to vector<1x8x1xf32>
    %cst_2 = arith.constant 6.400000e+01 : f32
    %3 = vector.broadcast %cst_2 : f32 to vector<1x8x1xf32>
    %4 = arith.divf %2, %3 : vector<1x8x1xf32>
    %5 = vector.broadcast %4 : vector<1x8x1xf32> to vector<1x8x64xf32>
    %6 = arith.subf %0, %5 : vector<1x8x64xf32>
    %7 = arith.mulf %6, %6 : vector<1x8x64xf32>
    %cst_3 = arith.constant dense<0.000000e+00> : vector<1x8xf32>
    %8 = vector.multi_reduction <add>, %7, %cst_3 [2] : vector<1x8x64xf32> to vector<1x8xf32>
    %9 = vector.shape_cast %8 : vector<1x8xf32> to vector<1x8x1xf32>
    %cst_4 = arith.constant 6.400000e+01 : f32
    %10 = vector.broadcast %cst_4 : f32 to vector<1x8x1xf32>
    %11 = arith.divf %9, %10 : vector<1x8x1xf32>
    %cst_5 = arith.constant 9.99999974E-6 : f32
    %12 = vector.broadcast %cst_5 : f32 to vector<1x8x1xf32>
    %13 = arith.addf %11, %12 : vector<1x8x1xf32>
    %14 = math.rsqrt %13 : vector<1x8x1xf32>
    %15 = vector.broadcast %14 : vector<1x8x1xf32> to vector<1x8x64xf32>
    %16 = arith.mulf %6, %15 : vector<1x8x64xf32>
    %c0_6 = arith.constant 0 : index
    %c0_7 = arith.constant 0 : index
    %c0_8 = arith.constant 0 : index
    %17 = vector.load %arg5[%c0_6, %c0_7, %c0_8] : memref<1x1x64xf32, #tpu.memory_space<vmem>>, vector<1x1x64xf32>
    %18 = vector.broadcast %17 : vector<1x1x64xf32> to vector<1x8x64xf32>
    %19 = arith.mulf %16, %18 : vector<1x8x64xf32>
    %c0_9 = arith.constant 0 : index
    %c0_10 = arith.constant 0 : index
    %c0_11 = arith.constant 0 : index
    %20 = vector.load %arg6[%c0_9, %c0_10, %c0_11] : memref<1x1x64xf32, #tpu.memory_space<vmem>>, vector<1x1x64xf32>
    %21 = vector.broadcast %20 : vector<1x1x64xf32> to vector<1x8x64xf32>
    %22 = arith.addf %19, %21 : vector<1x8x64xf32>
    %c0_12 = arith.constant 0 : index
    %c0_13 = arith.constant 0 : index
    %c0_14 = arith.constant 0 : index
    %23 = vector.load %arg4[%c0_12, %c0_13, %c0_14] : memref<1x8x64xf32, #tpu.memory_space<vmem>>, vector<1x8x64xf32>
    %24 = arith.addf %22, %23 : vector<1x8x64xf32>
    %c0_i32 = arith.constant 0 : i32
    %25 = arith.cmpi eq, %arg1, %c0_i32 : i32
    %26 = arith.extui %25 : i1 to i32
    %c0_i32_15 = arith.constant 0 : i32
    %27 = arith.cmpi ne, %26, %c0_i32_15 : i32
    scf.if %27 {
      %c0_18 = arith.constant 0 : index
      %c0_19 = arith.constant 0 : index
      %c0_20 = arith.constant 0 : index
      %32 = vector.load %arg3[%c0_18, %c0_19, %c0_20] : memref<1x1x64xf32, #tpu.memory_space<vmem>>, vector<1x1x64xf32>
      %c0_21 = arith.constant 0 : index
      %c0_22 = arith.constant 0 : index
      %c0_23 = arith.constant 0 : index
      %33 = vector.load %arg7[%c0_21, %c0_22, %c0_23] : memref<1x17x64xf32, #tpu.memory_space<vmem>>, vector<1x1x64xf32>
      tpu.vector_store %arg7[%c0_21, %c0_22, %c0_23], %32 {strides = array<i32>} : memref<1x17x64xf32, #tpu.memory_space<vmem>>, vector<1x1x64xf32>,
    } else {
    }
    %c8_i32 = arith.constant 8 : i32
    %28 = arith.muli %arg1, %c8_i32 : i32
    %c1_i32 = arith.constant 1 : i32
    %29 = arith.addi %c1_i32, %28 : i32
    %c0_16 = arith.constant 0 : index
    %30 = arith.index_cast %29 : i32 to index
    %c0_17 = arith.constant 0 : index
    %31 = vector.load %arg7[%c0_16, %30, %c0_17] : memref<1x17x64xf32, #tpu.memory_space<vmem>>, vector<1x8x64xf32>
    tpu.vector_store %arg7[%c0_16, %30, %c0_17], %24 {strides = array<i32>} : memref<1x17x64xf32, #tpu.memory_space<vmem>>, vector<1x8x64xf32>,
    return
  }
  func.func @transform_0(%arg0: i32, %arg1: i32) -> (i32, i32, i32) {
    %c0_i32 = arith.constant 0 : i32
    %c0_i32_0 = arith.constant 0 : i32
    return %arg0, %arg1, %c0_i32 : i32, i32, i32
  }
  func.func @transform_1(%arg0: i32, %arg1: i32) -> (i32, i32, i32) {
    %c0_i32 = arith.constant 0 : i32
    %c0_i32_0 = arith.constant 0 : i32
    %c0_i32_1 = arith.constant 0 : i32
    %c0_i32_2 = arith.constant 0 : i32
    return %c0_i32, %c0_i32_0, %c0_i32_1 : i32, i32, i32
  }
  func.func @transform_2(%arg0: i32, %arg1: i32) -> (i32, i32, i32) {
    %c0_i32 = arith.constant 0 : i32
    %c0_i32_0 = arith.constant 0 : i32
    %c0_i32_1 = arith.constant 0 : i32
    return %c0_i32, %arg1, %c0_i32_0 : i32, i32, i32
  }
  func.func @transform_3(%arg0: i32, %arg1: i32) -> (i32, i32, i32) {
    %c0_i32 = arith.constant 0 : i32
    %c0_i32_0 = arith.constant 0 : i32
    %c0_i32_1 = arith.constant 0 : i32
    %c0_i32_2 = arith.constant 0 : i32
    return %c0_i32, %c0_i32_0, %c0_i32_1 : i32, i32, i32
  }
  func.func @transform_4(%arg0: i32, %arg1: i32) -> (i32, i32, i32) {
    %c0_i32 = arith.constant 0 : i32
    %c0_i32_0 = arith.constant 0 : i32
    %c0_i32_1 = arith.constant 0 : i32
    %c0_i32_2 = arith.constant 0 : i32
    return %c0_i32, %c0_i32_0, %c0_i32_1 : i32, i32, i32
  }
  func.func @transform_5(%arg0: i32, %arg1: i32) -> (i32, i32, i32) {
    %c0_i32 = arith.constant 0 : i32
    %c0_i32_0 = arith.constant 0 : i32
    %c0_i32_1 = arith.constant 0 : i32
    return %arg0, %c0_i32, %c0_i32_0 : i32, i32, i32
  }
}

</mosaic_0001>

<llo_original>
// kernel: tpu_custom_call.1
$region0: #{tpu_custom_call.1}
  #allocation0 [shape = 'u32[]', space=smem, size = 0x4, offset = 0x4, fixed_abs, tag = 'smem constant byte address 0x4 - core index']
  #allocation1 [shape = 'u32[144,128]{1,0:T(1,128)}', space=vmem, size = 0x12000, scoped, tag = 'internal scratch']
  %s0 = inlined_call_operand.hbm [shape: f32[2,16,64], index: 0, kind: input, shape index: {}]
  %s1 = inlined_call_operand.vmem [shape: f32[1,1,64], index: 1, kind: input, shape index: {}]
  %s2 = inlined_call_operand.hbm [shape: f32[1,16,64], index: 2, kind: input, shape index: {}]
  %s3 = inlined_call_operand.vmem [shape: f32[1,1,64], index: 3, kind: input, shape index: {}]
  %s4 = inlined_call_operand.vmem [shape: f32[1,1,64], index: 4, kind: input, shape index: {}]
  %s5 = inlined_call_operand.vmem [shape: f32[2,17,64], index: 5, kind: output, shape index: {}]
  %s6 = sld [smem:[#allocation0]]
  $region65: #{tpu_custom_call.1} parent=0
    _
  %s8 = ssub.s32 1, %s6
  %s9 = scalar_select 0, %s8, %s6
  $region1: #{tpu_custom_call.1} parent=0
    #allocation2 [shape = 'u8[8192]{0}', space=vmem, size = 0x2000, scoped, tag = 'input window, operand 0']
    #allocation3 [shape = 's32[2]{0}', space=sflag, size = 0x8, scoped, tag = 'scoped memory for tpu_custom_call.1']
    #allocation4 [shape = 'u8[8192]{0}', space=vmem, size = 0x2000, scoped, tag = 'input window, operand 2']
    #allocation5 [shape = 's32[2]{0}', space=sflag, size = 0x8, scoped, tag = 'scoped memory for tpu_custom_call.1']
    %10 = vsyncpa [#allocation3], 0
    %s11 = scalar_lea.sflag [#allocation3], 1
    %12 = vsyncpa %s11, 0
    %13 = vsyncpa [#allocation5], 0
    %s14 = scalar_lea.sflag [#allocation5], 1
    %15 = vsyncpa %s14, 0
    loop: start=0, step=1, limit=6
    $region2: #{tpu_custom_call.1} parent=1 // loop_pre_header
      _
    $region3: #{tpu_custom_call.1} parent=1 // loop_header
      %s17 = sphi 0, %s21
      %p18 = scmp.ge.s32.totalorder %s17, 6
      %s24 = sphi 0, %s36
      %s25 = sphi 0, %s32
      %s26 = sphi 0, %s24
      %s27 = sphi 0, %s25
      %s28 = sphi 0, %s26
      %s29 = sphi 0, %s27
      %s41 = sphi 0, %s43
      %s44 = sphi 0, %s41
      %s45 = sphi 0, %s44
      %s61 = sphi 0, %s45
      %s65 = sphi 0, %s65
      %s67 = sphi 0, %s65
      %s68 = sphi 0, %s67
      %s82 = sphi 0, %s68
      %s88 = sphi 0, %s90
      %s91 = sphi 0, %s88
      %s92 = sphi 0, %s91
      %s108 = sphi 0, %s92
      %s112 = sphi 0, %s112
      %s114 = sphi 0, %s112
      %s115 = sphi 0, %s114
      %s129 = sphi 0, %s115
      %s133 = sphi 0, %s133
      %s135 = sphi 0, %s133
      %s136 = sphi 0, %s135
      %s150 = sphi 0, %s136
      %s156 = sphi 0, %s158
      %s159 = sphi 0, %s156
      %s160 = sphi 0, %s159
      %s176 = sphi 0, %s160
    $region4: #{tpu_custom_call.1} parent=1 // loop_header_branch
      %20 = sbr.rel (%p18) target = $region8
    $region5: #{tpu_custom_call.1} parent=1 // loop_body
      %s22 = ssub.s32 %s17, 1
      %s23 = ssub.s32 %s17, 2
      %s30 = sadd.s32 1, %s25
      %p31 = scmp.ge.s32.totalorder %s30, 2
      %s32 = scalar_select %p31, 0, %s30
      %s33 = sadd.s32 1, %s24
      %s34 = scalar_select %p31, %s33, %s24
      %p35 = scmp.ge.s32.totalorder %s34, 2
      %s36 = scalar_select %p35, 0, %s34
      %s37 = ssub.s32 %s24, %s36
      %s38 = ssub.s32 %s25, %s32
      %s39 = sor.u32 %s37, %s38
      %p40 = scmp.eq.s32.totalorder %s39, 0
      %s42 = sadd.s32 %s41, 1
      %s43 = scalar_select %p40, %s41, %s42
      %p46 = pneg %p40
      %p47 = scmp.eq.s32.totalorder %s17, 3
      %p48 = por %p46, %p47
      %p49 = scmp.ne.s32.totalorder %s41, %s44
      %p50 = scmp.eq.s32.totalorder %s17, 0
      %p51 = por %p49, %p50
      %p52 = scmp.ne.s32.totalorder %s41, %s44
      %p53 = scmp.eq.s32.totalorder %s22, 3
      %p54 = por %p52, %p53
      %p55 = scmp.ne.s32.totalorder %s44, %s45
      %p56 = scmp.eq.s32.totalorder %s22, 0
      %p57 = por %p55, %p56
      %p58 = scmp.ne.s32.totalorder %s44, %s45
      %p59 = scmp.eq.s32.totalorder %s23, 3
      %p60 = por %p58, %p59
      %p62 = scmp.ne.s32.totalorder %s45, %s61
      %p63 = scmp.eq.s32.totalorder %s23, 0
      %p64 = por %p62, %p63
      %s66 = sadd.s32 %s65, 1
      %p69 = scmp.eq.s32.totalorder %s17, 3
      %p70 = scmp.ne.s32.totalorder %s65, %s67
      %p71 = scmp.eq.s32.totalorder %s17, 0
      %p72 = por %p70, %p71
      %p73 = scmp.ne.s32.totalorder %s65, %s67
      %p74 = scmp.eq.s32.totalorder %s22, 3
      %p75 = por %p73, %p74
      %p76 = scmp.ne.s32.totalorder %s67, %s68
      %p77 = scmp.eq.s32.totalorder %s22, 0
      %p78 = por %p76, %p77
      %p79 = scmp.ne.s32.totalorder %s67, %s68
      %p80 = scmp.eq.s32.totalorder %s23, 3
      %p81 = por %p79, %p80
      %p83 = scmp.ne.s32.totalorder %s68, %s82
      %p84 = scmp.eq.s32.totalorder %s23, 0
      %p85 = por %p83, %p84
      %s86 = ssub.s32 %s25, %s32
      %p87 = scmp.eq.s32.totalorder %s86, 0
      %s89 = sadd.s32 %s88, 1
      %s90 = scalar_select %p87, %s88, %s89
      %p93 = pneg %p87
      %p94 = scmp.eq.s32.totalorder %s17, 3
      %p95 = por %p93, %p94
      %p96 = scmp.ne.s32.totalorder %s88, %s91
      %p97 = scmp.eq.s32.totalorder %s17, 0
      %p98 = por %p96, %p97
      %p99 = scmp.ne.s32.totalorder %s88, %s91
      %p100 = scmp.eq.s32.totalorder %s22, 3
      %p101 = por %p99, %p100
      %p102 = scmp.ne.s32.totalorder %s91, %s92
      %p103 = scmp.eq.s32.totalorder %s22, 0
      %p104 = por %p102, %p103
      %p105 = scmp.ne.s32.totalorder %s91, %s92
      %p106 = scmp.eq.s32.totalorder %s23, 3
      %p107 = por %p105, %p106
      %p109 = scmp.ne.s32.totalorder %s92, %s108
      %p110 = scmp.eq.s32.totalorder %s23, 0
      %p111 = por %p109, %p110
      %s113 = sadd.s32 %s112, 1
      %p116 = scmp.eq.s32.totalorder %s17, 3
      %p117 = scmp.ne.s32.totalorder %s112, %s114
      %p118 = scmp.eq.s32.totalorder %s17, 0
      %p119 = por %p117, %p118
      %p120 = scmp.ne.s32.totalorder %s112, %s114
      %p121 = scmp.eq.s32.totalorder %s22, 3
      %p122 = por %p120, %p121
      %p123 = scmp.ne.s32.totalorder %s114, %s115
      %p124 = scmp.eq.s32.totalorder %s22, 0
      %p125 = por %p123, %p124
      %p126 = scmp.ne.s32.totalorder %s114, %s115
      %p127 = scmp.eq.s32.totalorder %s23, 3
      %p128 = por %p126, %p127
      %p130 = scmp.ne.s32.totalorder %s115, %s129
      %p131 = scmp.eq.s32.totalorder %s23, 0
      %p132 = por %p130, %p131
      %s134 = sadd.s32 %s133, 1
      %p137 = scmp.eq.s32.totalorder %s17, 3
      %p138 = scmp.ne.s32.totalorder %s133, %s135
      %p139 = scmp.eq.s32.totalorder %s17, 0
      %p140 = por %p138, %p139
      %p141 = scmp.ne.s32.totalorder %s133, %s135
      %p142 = scmp.eq.s32.totalorder %s22, 3
      %p143 = por %p141, %p142
      %p144 = scmp.ne.s32.totalorder %s135, %s136
      %p145 = scmp.eq.s32.totalorder %s22, 0
      %p146 = por %p144, %p145
      %p147 = scmp.ne.s32.totalorder %s135, %s136
      %p148 = scmp.eq.s32.totalorder %s23, 3
      %p149 = por %p147, %p148
      %p151 = scmp.ne.s32.totalorder %s136, %s150
      %p152 = scmp.eq.s32.totalorder %s23, 0
      %p153 = por %p151, %p152
      %s154 = ssub.s32 %s24, %s36
      %p155 = scmp.eq.s32.totalorder %s154, 0
      %s157 = sadd.s32 %s156, 1
      %s158 = scalar_select %p155, %s156, %s157
      %p161 = pneg %p155
      %p162 = scmp.eq.s32.totalorder %s17, 3
      %p163 = por %p161, %p162
      %p164 = scmp.ne.s32.totalorder %s156, %s159
      %p165 = scmp.eq.s32.totalorder %s17, 0
      %p166 = por %p164, %p165
      %p167 = scmp.ne.s32.totalorder %s156, %s159
      %p168 = scmp.eq.s32.totalorder %s22, 3
      %p169 = por %p167, %p168
      %p170 = scmp.ne.s32.totalorder %s159, %s160
      %p171 = scmp.eq.s32.totalorder %s22, 0
      %p172 = por %p170, %p171
      %p173 = scmp.ne.s32.totalorder %s159, %s160
      %p174 = scmp.eq.s32.totalorder %s23, 3
      %p175 = por %p173, %p174
      %p177 = scmp.ne.s32.totalorder %s160, %s176
      %p178 = scmp.eq.s32.totalorder %s23, 0
      %p179 = por %p177, %p178
      %p180 = scmp.le.s32.totalorder 1, %s17
      %p181 = scmp.lt.s32.totalorder %s17, 5
      %p182 = pnand %p180, %p181
      %p183 = pneg %p182
      // Predicated region
      $region9: #{tpu_custom_call.1} parent=5 // pred_check
        _
      $region10: #{tpu_custom_call.1} parent=5 // pred_check_branch
        %185 = sbr.rel (%p182) target = $region12
      $region11: #{tpu_custom_call.1} parent=5 // pred_region
        %s186 = ssub.s32 %s17, 1
        // Predicated region
        $region13: #{tpu_custom_call.1} parent=11 // pred_check
          %p187 = pneg %p78
        $region14: #{tpu_custom_call.1} parent=11 // pred_check_branch
          %189 = sbr.rel (%p187) target = $region16
        $region15: #{tpu_custom_call.1} parent=11 // pred_region
          _
        $region16: #{tpu_custom_call.1} parent=11 // pred_fallthru
          _
        // Predicated region
        $region17: #{tpu_custom_call.1} parent=11 // pred_check
          %p190 = pneg %p125
        $region18: #{tpu_custom_call.1} parent=11 // pred_check_branch
          %192 = sbr.rel (%p190) target = $region20
        $region19: #{tpu_custom_call.1} parent=11 // pred_region
          _
        $region20: #{tpu_custom_call.1} parent=11 // pred_fallthru
          _
        // Predicated region
        $region21: #{tpu_custom_call.1} parent=11 // pred_check
          %p193 = pneg %p146
        $region22: #{tpu_custom_call.1} parent=11 // pred_check_branch
          %195 = sbr.rel (%p193) target = $region24
        $region23: #{tpu_custom_call.1} parent=11 // pred_region
          _
        $region24: #{tpu_custom_call.1} parent=11 // pred_fallthru
          _
      $region12: #{tpu_custom_call.1} parent=5 // pred_fallthru
        _
      %p196 = scmp.lt.s32.totalorder %s17, 4
      // Predicated region
      $region25: #{tpu_custom_call.1} parent=5 // pred_check
        %p197 = pneg %p196
      $region26: #{tpu_custom_call.1} parent=5 // pred_check_branch
        %199 = sbr.rel (%p197) target = $region28
      $region27: #{tpu_custom_call.1} parent=5 // pred_region
        // Predicated region
        $region29: #{tpu_custom_call.1} parent=27 // pred_check
          %p200 = pneg %p51
        $region30: #{tpu_custom_call.1} parent=27 // pred_check_branch
          %202 = sbr.rel (%p200) target = $region32
        $region31: #{tpu_custom_call.1} parent=27 // pred_region
          %s203 = sand.u32 %s41, 1
          %s204 = scalar_lea.sflag [#allocation3], %s203
          %s205 = sand.u32 %s41, 1
          %s206 = smul.addr %s205, 8
          %s207 = scalar_lea.vmem [#allocation2], %s206
          %s209 = ssub.s32 128, 128
          %210 = vsyncadd %s204, %s209
          %s211 = smul.addr %s24, 2
          %s212 = sadd.s32 %s25, %s211
          %s213 = smul.addr %s212, 128
          %s214 = scalar_lea.hbm %s0, %s213
          %s216 = sshll.u32 %s207, 4
          %s217 = int_to_ptr.vmem [resolvable:$true] %s216
          %219 = dma.hbm_to_vmem [thread:$0]  %s214, 128, %s217, %s204
        $region32: #{tpu_custom_call.1} parent=27 // pred_fallthru
          _
        // Predicated region
        $region33: #{tpu_custom_call.1} parent=27 // pred_check
          %p220 = pneg %p98
        $region34: #{tpu_custom_call.1} parent=27 // pred_check_branch
          %222 = sbr.rel (%p220) target = $region36
        $region35: #{tpu_custom_call.1} parent=27 // pred_region
          %s223 = sand.u32 %s88, 1
          %s224 = scalar_lea.sflag [#allocation5], %s223
          %s225 = sand.u32 %s88, 1
          %s226 = smul.addr %s225, 8
          %s227 = scalar_lea.vmem [#allocation4], %s226
          %s229 = ssub.s32 128, 128
          %230 = vsyncadd %s224, %s229
          %s231 = smul.addr %s25, 128
          %s232 = scalar_lea.hbm %s2, %s231
          %s234 = sshll.u32 %s227, 4
          %s235 = int_to_ptr.vmem [resolvable:$true] %s234
          %237 = dma.hbm_to_vmem [thread:$0]  %s232, 128, %s235, %s224
        $region36: #{tpu_custom_call.1} parent=27 // pred_fallthru
          _
      $region28: #{tpu_custom_call.1} parent=5 // pred_fallthru
        _
      %p238 = scmp.le.s32.totalorder 1, %s17
      %p239 = scmp.lt.s32.totalorder %s17, 5
      %p240 = pnand %p238, %p239
      %p241 = pneg %p240
      // Predicated region
      $region37: #{tpu_custom_call.1} parent=5 // pred_check
        _
      $region38: #{tpu_custom_call.1} parent=5 // pred_check_branch
        %243 = sbr.rel (%p240) target = $region40
      $region39: #{tpu_custom_call.1} parent=5 // pred_region
        %s244 = ssub.s32 %s17, 1
        %s245 = sand.u32 %s44, 1
        %s246 = scalar_lea.sflag [#allocation3], %s245
        %s247 = sand.u32 %s44, 1
        %s248 = smul.addr %s247, 8
        %s249 = scalar_lea.vmem [#allocation2], %s248
        // Predicated region
        $region41: #{tpu_custom_call.1} parent=39 // pred_check
          %p250 = pneg %p57
        $region42: #{tpu_custom_call.1} parent=39 // pred_check_branch
          %252 = sbr.rel (%p250) target = $region44
        $region43: #{tpu_custom_call.1} parent=39 // pred_region
          %253 = dma.done %s246, 128
        $region44: #{tpu_custom_call.1} parent=39 // pred_fallthru
          _
        %s254 = sand.u32 %s91, 1
        %s255 = scalar_lea.sflag [#allocation5], %s254
        %s256 = sand.u32 %s91, 1
        %s257 = smul.addr %s256, 8
        %s258 = scalar_lea.vmem [#allocation4], %s257
        // Predicated region
        $region45: #{tpu_custom_call.1} parent=39 // pred_check
          %p259 = pneg %p104
        $region46: #{tpu_custom_call.1} parent=39 // pred_check_branch
          %261 = sbr.rel (%p259) target = $region48
        $region47: #{tpu_custom_call.1} parent=39 // pred_region
          %262 = dma.done %s255, 128
        $region48: #{tpu_custom_call.1} parent=39 // pred_fallthru
          _
        %s263 = sand.u32 %s44, 1
        %s264 = scalar_lea.sflag [#allocation3], %s263
        %s265 = sand.u32 %s44, 1
        %s266 = smul.addr %s265, 8
        %s267 = scalar_lea.vmem [#allocation2], %s266
        %p268 = pneg %p57
        %p269 = pneg %p54
        %p270 = pneg %p78
        %p271 = pneg %p75
        %s272 = sand.u32 %s91, 1
        %s273 = scalar_lea.sflag [#allocation5], %s272
        %s274 = sand.u32 %s91, 1
        %s275 = smul.addr %s274, 8
        %s276 = scalar_lea.vmem [#allocation4], %s275
        %p277 = pneg %p104
        %p278 = pneg %p101
        %p279 = pneg %p125
        %p280 = pneg %p122
        %p281 = pneg %p146
        %p282 = pneg %p143
        %p283 = pneg %p172
        %p284 = pneg %p169
        %p285 = scmp.lt.s32.totalorder %s26, 1
        %s286 = scalar_select %p285, %s26, 1
        %s287 = smul.addr %s286, 3
        %s288 = smul.addr %s287, 8
        %s289 = scalar_lea.vmem %s5, %s288
        %p290 = scmp.lt.s32.totalorder %s26, 1
        %s291 = scalar_select %p290, %s26, 1
        %s292 = smul.addr %s291, 3
        %s293 = smul.addr %s292, 8
        %s294 = scalar_lea.vmem %s5, %s293
        %v295 = vld [vmem:[%s249] sm:$0xff]
        %vm296 = vcmask 523264
        %v297 = vsel %vm296, %v295, 0.0
        %298 = vadd.xlane.f32.xlu0 %v297
        %v299 = vpop.xlane.xlu0 %298
        %v300 = vrcp.pop 64.0
        %v301 = vmul.f32 %v299, %v300
        %v302 = vsub.f32 %v295, %v301
        %v303 = vmul.f32 %v302, %v302
        %v304 = vsel %vm296, %v303, 0.0
        %305 = vadd.xlane.f32.xlu0 %v304
        %v306 = vpop.xlane.xlu0 %305
        %v307 = vmul.f32 %v306, %v300
        %v308 = vadd.f32 %v307, 1e-05
        %v309 = vrsqrt.pop %v308
        %v310 = vmul.f32 %v302, %v309
        %v311 = vld [vmem:[%s3] sm:$0x1]
        %v313 = vlaneseq
        %v314 = vshrl.u32 %v313, 7
        %v315 = vsub.s32 0, %v314
        %v316 = vrot.slane %v311, %v315
        %v318 = vmul.f32 %v310, %v316
        %v319 = vld [vmem:[%s4] sm:$0x1]
        %v321 = vlaneseq
        %v322 = vshrl.u32 %v321, 7
        %v323 = vsub.s32 0, %v322
        %v324 = vrot.slane %v319, %v323
        %v326 = vadd.f32 %v318, %v324
        %v327 = vld [vmem:[%s258] sm:$0xff]
        %v328 = vadd.f32 %v326, %v327
        %p329 = scmp.eq.s32.totalorder %s27, 0
        // Predicated region
        $region49: #{tpu_custom_call.1} parent=39 // pred_check
          %p330 = pneg %p329
        $region50: #{tpu_custom_call.1} parent=39 // pred_check_branch
          %332 = sbr.rel (%p330) target = $region52
        $region51: #{tpu_custom_call.1} parent=39 // pred_region
          %v333 = vld [vmem:[%s1] sm:$0x1]
          %vm334 = vcmask 516096
          %335 = vst.msk [vmem:[%s294] sm:$0x1] %vm334, %v333
        $region52: #{tpu_custom_call.1} parent=39 // pred_fallthru
          _
        %s336 = smul.u32 %s27, 8
        %s337 = sadd.s32 %s336, 1
        %s338 = scalar_lea.vmem %s294, %s337
        %339 = vst.msk [vmem:[%s338] sm:$0xff] %vm296, %v328
        %p340 = scmp.lt.s32.totalorder %s26, 1
        %s341 = scalar_select %p340, %s26, 1
        %s342 = smul.addr %s341, 3
        %s343 = smul.addr %s342, 8
        %s344 = scalar_lea.vmem %s5, %s343
        // Predicated region
        $region53: #{tpu_custom_call.1} parent=39 // pred_check
          %p345 = pneg %p169
        $region54: #{tpu_custom_call.1} parent=39 // pred_check_branch
          %347 = sbr.rel (%p345) target = $region56
        $region55: #{tpu_custom_call.1} parent=39 // pred_region
          _
        $region56: #{tpu_custom_call.1} parent=39 // pred_fallthru
          _
      $region40: #{tpu_custom_call.1} parent=5 // pred_fallthru
        _
      %p348 = scmp.le.s32.totalorder 2, %s17
      // Predicated region
      $region57: #{tpu_custom_call.1} parent=5 // pred_check
        %p349 = pneg %p348
      $region58: #{tpu_custom_call.1} parent=5 // pred_check_branch
        %351 = sbr.rel (%p349) target = $region60
      $region59: #{tpu_custom_call.1} parent=5 // pred_region
        %s352 = ssub.s32 %s17, 2
        // Predicated region
        $region61: #{tpu_custom_call.1} parent=59 // pred_check
          %p353 = pneg %p175
        $region62: #{tpu_custom_call.1} parent=59 // pred_check_branch
          %355 = sbr.rel (%p353) target = $region64
        $region63: #{tpu_custom_call.1} parent=59 // pred_region
          %p356 = scmp.lt.s32.totalorder %s28, 1
          %s357 = scalar_select %p356, %s28, 1
          %s358 = smul.addr %s357, 3
          %s359 = smul.addr %s358, 8
          %s360 = scalar_lea.vmem %s5, %s359
        $region64: #{tpu_custom_call.1} parent=59 // pred_fallthru
          _
      $region60: #{tpu_custom_call.1} parent=5 // pred_fallthru
        _
    $region6: #{tpu_custom_call.1} parent=1 // loop_footer
      %s21 = sadd.s32 1, %s17
    $region7: #{tpu_custom_call.1} parent=1 // loop_footer_branch
      %16 = sbr.rel target = $region3
    $region8: #{tpu_custom_call.1} parent=1 // loop_exit
      _
    %361 = vsyncpa [#allocation3], 1
    %s362 = scalar_lea.sflag [#allocation3], 1
    %363 = vsyncpa %s362, 1
    %364 = vsyncpa [#allocation5], 1
    %s365 = scalar_lea.sflag [#allocation5], 1
    %366 = vsyncpa %s365, 1

</llo_original>
